<compile_context>
chip_gen: v7x
topology: tpu7x:2x2x1
jax: 0.10.0
libtpu: 0.0.40
codegen_flags: <defaults>
</compile_context>

<pallas_src>
import jax
import jax.numpy as jnp
from jax.experimental import pallas as pl
from jax.experimental.pallas import tpu as pltpu


def _rff_kernel(v_ref, w_ref, phase_ref, out_ref):
    # v_ref:     (TM, DP)   packed input rows (DP = pack_k * D)
    # w_ref:     (DP, L)    block-diag, pre-scaled (2*pi*B).T duplicated for cos|sin
    # phase_ref: (1, L)     0 on cos lanes, -pi/2 on sin lanes
    # out_ref:   (TM, L)    lane-dense encoded output tile
    dp = v_ref.shape[1]
    vv = v_ref[...]
    ww = w_ref[...]

    if dp < 16:
        # Tiny contraction: VPU path (unrolled rank-1 updates), skip the MXU.
        vp = vv[:, 0:1] * ww[0:1, :]
        for k in range(1, dp):
            vp = vp + vv[:, k : k + 1] * ww[k : k + 1, :]
    else:
        vp = jnp.dot(vv, ww, preferred_element_type=jnp.float32)

    # Single uniform transcendental stream + single lane-dense store.
    out_ref[...] = jnp.cos(vp + phase_ref[...]).astype(out_ref.dtype)


def _round_up(x: int, m: int) -> int:
    return ((x + m - 1) // m) * m


def _choose_tile_m(m_rows: int, dp: int, l_out: int, out_itemsize: int,
                   *, tile_bytes_budget: int = 20 << 20) -> int:
    """Row tile: as large as fits the tile budget, counted with (8,128)-padded,
    double-buffered VMEM footprints; capped so the grid has >= 2 steps when the
    problem is big enough to benefit (v7x megacore); multiple of 8 unless the
    whole array fits in one block."""
    in_row = _round_up(dp, 128) * 4                      # f32 input rows, lane-padded
    out_row = _round_up(l_out, 128) * out_itemsize       # output rows, lane-padded
    per_row = 2 * (in_row + out_row)                     # double-buffered in + out
    tile = tile_bytes_budget // max(per_row, 1)
    tile = min(tile, 16384)
    tile = max(tile, 8)
    # Keep at least 2 grid steps so dimension_semantics=('parallel',) can shard
    # across v7x's two TensorCores.
    if m_rows > 1024:
        tile = min(tile, _round_up((m_rows + 1) // 2, 8))
    if tile >= m_rows:
        return m_rows  # single block; block dim == full array dim is allowed
    return max(8, (tile // 8) * 8)


def gaussian_encoding_pallas(v: jax.Array, b: jax.Array, *,
                             tile_m: int | None = None,
                             out_dtype=None) -> jax.Array:
    """Pallas equivalent of rff.layers.GaussianEncoding.forward."""
    d = int(v.shape[-1])
    e = int(b.shape[0])
    assert b.shape[1] == d, "b must have shape (encoded_size, input_size)"
    two_e = 2 * e
    out_dtype = jnp.dtype(v.dtype) if out_dtype is None else jnp.dtype(out_dtype)

    lead = v.shape[:-1]
    m = 1
    for s in lead:
        m *= int(s)
    v2 = v.reshape(m, d).astype(jnp.float32)

    # Row packing: fold pack_k logical rows into one kernel row so the output
    # last dim is a lane-dense multiple of 128. Pure row-major reinterpretation
    # of both input and output bytes (no data movement).
    if two_e < 128 and 128 % two_e == 0 and m % (128 // two_e) == 0:
        pack_k = 128 // two_e
    else:
        pack_k = 1
    dp = pack_k * d
    l_out = pack_k * two_e
    m_rows = m // pack_k
    v_packed = v2.reshape(m_rows, dp)

    # One-time projection prep: fold 2*pi, transpose, duplicate for cos|sin,
    # and lay out block-diagonally for the packed rows. sin(x) = cos(x - pi/2).
    bt = (2.0 * jnp.pi) * b.astype(jnp.float32).T                 # (D, E)
    bt2 = jnp.concatenate([bt, bt], axis=1)                       # (D, 2E)
    if pack_k > 1:
        w = jnp.kron(jnp.eye(pack_k, dtype=jnp.float32), bt2)    # (k*D, k*2E)
    else:
        w = bt2
    phase_row = jnp.concatenate(
        [jnp.zeros((e,), jnp.float32), jnp.full((e,), -0.5 * jnp.pi, jnp.float32)]
    )
    phase = jnp.tile(phase_row, pack_k).reshape(1, l_out)

    if tile_m is None:
        tile_m = _choose_tile_m(m_rows, dp, l_out, out_dtype.itemsize)

    grid = pl.cdiv(m_rows, tile_m)  # partial last block is masked by Pallas

    # Scoped VMEM: (8,128)-padded, double-buffered tile footprints + constants.
    in_row = _round_up(dp, 128) * 4
    out_row = _round_up(l_out, 128) * out_dtype.itemsize
    footprint = 2 * tile_m * (in_row + out_row)
    footprint += 2 * (_round_up(dp, 8) + 8) * _round_up(l_out, 128) * 4  # W + phase
    vmem_limit = int(min(56 << 20, max(32 << 20, footprint + (4 << 20))))

    out = pl.pallas_call(
        _rff_kernel,
        out_shape=jax.ShapeDtypeStruct((m_rows, l_out), out_dtype),
        grid_spec=pltpu.PrefetchScalarGridSpec(
            num_scalar_prefetch=0,
            grid=(grid,),
            in_specs=[
                pl.BlockSpec((tile_m, dp), lambda i: (i, 0)),
                pl.BlockSpec((dp, l_out), lambda i: (0, 0)),
                pl.BlockSpec((1, l_out), lambda i: (0, 0)),
            ],
            out_specs=pl.BlockSpec((tile_m, l_out), lambda i: (i, 0)),
        ),
        compiler_params=pltpu.CompilerParams(
            dimension_semantics=("parallel",),
            vmem_limit_bytes=vmem_limit,
        ),
    )(v_packed, w, phase)

    # (m_rows, k*2E) row-major == (m, 2E) row-major: pure reshape, no copy pass.
    return out.reshape(*lead, two_e)


def gaussian_encoding_ref(v, b):
    vp = 2.0 * jnp.pi * jnp.matmul(v, b.T)
    return jnp.concatenate([jnp.cos(vp), jnp.sin(vp)], axis=-1)


if __name__ == "__main__":
    key = jax.random.PRNGKey(0)
    k_b, k_v = jax.random.split(key)

    # Module params: GaussianEncoding(sigma=10.0, input_size=2, encoded_size=32)
    sigma = 10.0
    input_size = 2
    encoded_size = 32
    b = jax.random.normal(k_b, (encoded_size, input_size), dtype=jnp.float32) * sigma

    # Input: (N, *, input_size) -> (2, 8, 2), e.g. batch of coordinate sequences.
    v = jax.random.normal(k_v, (2, 8, input_size), dtype=jnp.float32)

    out = jax.block_until_ready(gaussian_encoding_pallas(v, b))
    ref = gaussian_encoding_ref(v, b)
    assert out.shape == (2, 8, 2 * encoded_size), out.shape
    assert jnp.allclose(out, ref, atol=1e-4, rtol=1e-4), float(jnp.max(jnp.abs(out - ref)))

    # Odd M exercises the pack_k=1 fallback (no padding, masked partial block).
    v_odd = jax.random.normal(jax.random.PRNGKey(1), (3, 137, input_size), dtype=jnp.float32)
    out_odd = jax.block_until_ready(gaussian_encoding_pallas(v_odd, b))
    ref_odd = gaussian_encoding_ref(v_odd, b)
    assert out_odd.shape == (3, 137, 2 * encoded_size), out_odd.shape
    assert jnp.allclose(out_odd, ref_odd, atol=1e-4, rtol=1e-4), float(
        jnp.max(jnp.abs(out_odd - ref_odd))
    )

    # Larger even M: row packing (128-lane store), >= 2 grid steps, partial block.
    v_big = jax.random.normal(jax.random.PRNGKey(2), (4, 2001, input_size), dtype=jnp.float32)
    out_big = jax.block_until_ready(gaussian_encoding_pallas(v_big, b))
    ref_big = gaussian_encoding_ref(v_big, b)
    assert out_big.shape == (4, 2001, 2 * encoded_size), out_big.shape
    assert jnp.allclose(out_big, ref_big, atol=1e-4, rtol=1e-4), float(
        jnp.max(jnp.abs(out_big - ref_big))
    )

    # Optional bf16 output path (cos argument stays f32, cast only at the store).
    out_bf16 = jax.block_until_ready(
        gaussian_encoding_pallas(v, b, out_dtype=jnp.bfloat16)
    )
    assert out_bf16.dtype == jnp.bfloat16
    assert jnp.allclose(out_bf16.astype(jnp.float32), ref, atol=2e-2, rtol=2e-2)

    print("KERNEL_OK")
</pallas_src>

<mosaic_0001>
module attributes {stable_mosaic.version = 11 : i64} {
  func.func @_rff_kernel(%arg0: i32, %arg1: memref<8x4xf32, #tpu.memory_space<vmem>>, %arg2: memref<4x128xf32, #tpu.memory_space<vmem>>, %arg3: memref<1x128xf32, #tpu.memory_space<vmem>>, %arg4: memref<8x128xf32, #tpu.memory_space<vmem>>) attributes {dimension_semantics = [#tpu.dimension_semantics<parallel>], iteration_bounds = array<i64: 1>, scalar_prefetch = 0 : i64, scratch_operands = 0 : i64, tpu.core_type = #tpu.core_type<tc>, window_params = [{transform_indices = @transform_0, window_bounds = array<i64: 8, 4>}, {pipeline_mode = #tpu.pipeline_mode<synchronous>, transform_indices = @transform_1, window_bounds = array<i64: 4, 128>}, {pipeline_mode = #tpu.pipeline_mode<synchronous>, transform_indices = @transform_2, window_bounds = array<i64: 1, 128>}, {transform_indices = @transform_3, window_bounds = array<i64: 8, 128>}]} {
    %c0 = arith.constant 0 : index
    %c0_0 = arith.constant 0 : index
    %0 = vector.load %arg1[%c0, %c0_0] : memref<8x4xf32, #tpu.memory_space<vmem>>, vector<8x4xf32>
    %c0_1 = arith.constant 0 : index
    %c0_2 = arith.constant 0 : index
    %1 = vector.load %arg2[%c0_1, %c0_2] : memref<4x128xf32, #tpu.memory_space<vmem>>, vector<4x128xf32>
    %2 = vector.extract_strided_slice %0 {offsets = [0, 0], sizes = [8, 1], strides = [1, 1]} : vector<8x4xf32> to vector<8x1xf32>
    %3 = vector.extract_strided_slice %1 {offsets = [0, 0], sizes = [1, 128], strides = [1, 1]} : vector<4x128xf32> to vector<1x128xf32>
    %4 = vector.broadcast %2 : vector<8x1xf32> to vector<8x128xf32>
    %5 = vector.broadcast %3 : vector<1x128xf32> to vector<8x128xf32>
    %6 = arith.mulf %4, %5 : vector<8x128xf32>
    %7 = vector.extract_strided_slice %0 {offsets = [0, 1], sizes = [8, 1], strides = [1, 1]} : vector<8x4xf32> to vector<8x1xf32>
    %8 = vector.extract_strided_slice %1 {offsets = [1, 0], sizes = [1, 128], strides = [1, 1]} : vector<4x128xf32> to vector<1x128xf32>
    %9 = vector.broadcast %7 : vector<8x1xf32> to vector<8x128xf32>
    %10 = vector.broadcast %8 : vector<1x128xf32> to vector<8x128xf32>
    %11 = arith.mulf %9, %10 : vector<8x128xf32>
    %12 = arith.addf %6, %11 : vector<8x128xf32>
    %13 = vector.extract_strided_slice %0 {offsets = [0, 2], sizes = [8, 1], strides = [1, 1]} : vector<8x4xf32> to vector<8x1xf32>
    %14 = vector.extract_strided_slice %1 {offsets = [2, 0], sizes = [1, 128], strides = [1, 1]} : vector<4x128xf32> to vector<1x128xf32>
    %15 = vector.broadcast %13 : vector<8x1xf32> to vector<8x128xf32>
    %16 = vector.broadcast %14 : vector<1x128xf32> to vector<8x128xf32>
    %17 = arith.mulf %15, %16 : vector<8x128xf32>
    %18 = arith.addf %12, %17 : vector<8x128xf32>
    %19 = vector.extract_strided_slice %0 {offsets = [0, 3], sizes = [8, 1], strides = [1, 1]} : vector<8x4xf32> to vector<8x1xf32>
    %20 = vector.extract_strided_slice %1 {offsets = [3, 0], sizes = [1, 128], strides = [1, 1]} : vector<4x128xf32> to vector<1x128xf32>
    %21 = vector.broadcast %19 : vector<8x1xf32> to vector<8x128xf32>
    %22 = vector.broadcast %20 : vector<1x128xf32> to vector<8x128xf32>
    %23 = arith.mulf %21, %22 : vector<8x128xf32>
    %24 = arith.addf %18, %23 : vector<8x128xf32>
    %c0_3 = arith.constant 0 : index
    %c0_4 = arith.constant 0 : index
    %25 = vector.load %arg3[%c0_3, %c0_4] : memref<1x128xf32, #tpu.memory_space<vmem>>, vector<1x128xf32>
    %26 = vector.broadcast %25 : vector<1x128xf32> to vector<8x128xf32>
    %27 = arith.addf %24, %26 : vector<8x128xf32>
    %28 = math.cos %27 : vector<8x128xf32>
    %c0_5 = arith.constant 0 : index
    %c0_6 = arith.constant 0 : index
    %29 = vector.load %arg4[%c0_5, %c0_6] : memref<8x128xf32, #tpu.memory_space<vmem>>, vector<8x128xf32>
    tpu.vector_store %arg4[%c0_5, %c0_6], %28 {strides = array<i32>} : memref<8x128xf32, #tpu.memory_space<vmem>>, vector<8x128xf32>,
    return
  }
  func.func @transform_0(%arg0: i32) -> (i32, i32) {
    %c0_i32 = arith.constant 0 : i32
    %c0_i32_0 = arith.constant 0 : i32
    return %arg0, %c0_i32 : i32, i32
  }
  func.func @transform_1(%arg0: i32) -> (i32, i32) {
    %c0_i32 = arith.constant 0 : i32
    %c0_i32_0 = arith.constant 0 : i32
    %c0_i32_1 = arith.constant 0 : i32
    return %c0_i32, %c0_i32_0 : i32, i32
  }
  func.func @transform_2(%arg0: i32) -> (i32, i32) {
    %c0_i32 = arith.constant 0 : i32
    %c0_i32_0 = arith.constant 0 : i32
    %c0_i32_1 = arith.constant 0 : i32
    return %c0_i32, %c0_i32_0 : i32, i32
  }
  func.func @transform_3(%arg0: i32) -> (i32, i32) {
    %c0_i32 = arith.constant 0 : i32
    %c0_i32_0 = arith.constant 0 : i32
    return %arg0, %c0_i32 : i32, i32
  }
}

</mosaic_0001>

<llo_original>
// kernel: tpu_custom_call.1
$region0: #{tpu_custom_call.1}
  #allocation0 [shape = 'u32[]', space=smem, size = 0x4, offset = 0x4, fixed_abs, tag = 'smem constant byte address 0x4 - core index']
  #allocation1 [shape = 'u32[144,128]{1,0:T(1,128)}', space=vmem, size = 0x12000, scoped, tag = 'internal scratch']
  %s0 = inlined_call_operand.vmem [shape: f32[8,4], index: 0, kind: input, shape index: {}]
  %s1 = inlined_call_operand.vmem [shape: f32[4,128], index: 1, kind: input, shape index: {}]
  %s2 = inlined_call_operand.vmem [shape: f32[1,128], index: 2, kind: input, shape index: {}]
  %s3 = inlined_call_operand.hbm [shape: f32[8,128], index: 3, kind: output, shape index: {}]
  %s4 = sld [smem:[#allocation0]]
  $region22: #{tpu_custom_call.1} parent=0
    _
  %s6 = ssub.s32 1, %s4
  %s7 = scalar_select 0, %s6, %s4
  $region1: #{tpu_custom_call.1} parent=0
    #allocation2 [shape = 'u8[4096]{0}', space=vmem, size = 0x1000, scoped, tag = 'output window, operand 0, single buffered']
    #allocation3 [shape = 's32[1]{0}', space=sflag, size = 0x4, scoped, tag = 'scoped memory for tpu_custom_call.1']
    %8 = vsyncpa [#allocation3], 0
    // Predicated region
    $region2: #{tpu_custom_call.1} parent=1 // pred_check
      _
    $region3: #{tpu_custom_call.1} parent=1 // pred_check_branch
      %10 = sbr.rel (0) target = $region5
    $region4: #{tpu_custom_call.1} parent=1 // pred_region
      _
    $region5: #{tpu_custom_call.1} parent=1 // pred_fallthru
      _
    // Predicated region
    $region6: #{tpu_custom_call.1} parent=1 // pred_check
      _
    $region7: #{tpu_custom_call.1} parent=1 // pred_check_branch
      %12 = sbr.rel (0) target = $region9
    $region8: #{tpu_custom_call.1} parent=1 // pred_region
      _
    $region9: #{tpu_custom_call.1} parent=1 // pred_fallthru
      _
    // Predicated region
    $region10: #{tpu_custom_call.1} parent=1 // pred_check
      _
    $region11: #{tpu_custom_call.1} parent=1 // pred_check_branch
      %14 = sbr.rel (0) target = $region13
    $region12: #{tpu_custom_call.1} parent=1 // pred_region
      _
    $region13: #{tpu_custom_call.1} parent=1 // pred_fallthru
      _
    %v15 = vld [vmem:[%s0] sm:$0xff]
    %v16 = vld [vmem:[%s1] sm:$0xf]
    %18 = vset.pattern.permute.xlu0 0
    %19 = vperm.xlu0 %18, %v15
    %v20 = vpop.permute.xlu0 %19
    %v22 = vlaneseq
    %v23 = vshrl.u32 %v22, 7
    %v24 = vsub.s32 0, %v23
    %v25 = vrot.slane %v16, %v24
    %v26 = vmul.f32 %v20, %v25
    %27 = vset.pattern.permute.xlu0 1
    %28 = vperm.xlu0 %27, %v15
    %v29 = vpop.permute.xlu0 %28
    %v31 = vlaneseq
    %v32 = vshrl.u32 %v31, 7
    %v33 = vsub.s32 1, %v32
    %v34 = vrot.slane %v16, %v33
    %v35 = vmul.f32 %v29, %v34
    %v36 = vadd.f32 %v26, %v35
    %37 = vset.pattern.permute.xlu0 2
    %38 = vperm.xlu0 %37, %v15
    %v39 = vpop.permute.xlu0 %38
    %v41 = vlaneseq
    %v42 = vshrl.u32 %v41, 7
    %v43 = vsub.s32 2, %v42
    %v44 = vrot.slane %v16, %v43
    %v45 = vmul.f32 %v39, %v44
    %v46 = vadd.f32 %v36, %v45
    %47 = vset.pattern.permute.xlu0 3
    %48 = vperm.xlu0 %47, %v15
    %v49 = vpop.permute.xlu0 %48
    %v51 = vlaneseq
    %v52 = vshrl.u32 %v51, 7
    %v53 = vsub.s32 3, %v52
    %v54 = vrot.slane %v16, %v53
    %v55 = vmul.f32 %v49, %v54
    %v56 = vadd.f32 %v46, %v55
    %v57 = vld [vmem:[%s2] sm:$0x1]
    %v59 = vlaneseq
    %v60 = vshrl.u32 %v59, 7
    %v61 = vsub.s32 0, %v60
    %v62 = vrot.slane %v57, %v61
    %v64 = vadd.f32 %v56, %v62
    %v65 = vand.u32 2147483647, %v64
    %vm66 = vcmp.le.f32.partialorder %v65, 0.7853982
    %vm67 = vcmp.lt.s32.totalorder %v64, 0
    %v68 = vand.u32 %v64, 2139095040
    %v69 = vshrl.u32 %v68, 23
    %v70 = vsub.s32 %v69, 127
    %v71 = vand.u32 2147483647, %v64
    %v72 = vand.u32 %v71, 8388607
    %v73 = vor.u32 %v72, 8388608
    %v74 = vsub.s32 0, %v73
    %v75 = vadd.s32 %v70, 1
    %vm76 = vcmp.gt.s32.totalorder %v75, 0
    %v77 = vsel %vm76, %v75, 0
    %v78 = vshrl.u32 %v77, 5
    %v79 = vand.u32 %v77, 31
    %v80 = vsub.s32 32, %v79
    %v81 = vshrl.u32 683565275, %v80
    %v82 = vshll.u32 683565275, %v79
    %v83 = vshrl.u32 2475754826, %v80
    %v84 = vor.u32 %v82, %v83
    %v85 = vshll.u32 2475754826, %v79
    %v86 = vshrl.u32 2131351028, %v80
    %v87 = vor.u32 %v85, %v86
    %v88 = vshll.u32 2131351028, %v79
    %v89 = vshrl.u32 2102212464, %v80
    %v90 = vor.u32 %v88, %v89
    %v91 = vshll.u32 2102212464, %v79
    %v92 = vshrl.u32 920167782, %v80
    %v93 = vor.u32 %v91, %v92
    %v94 = vshll.u32 920167782, %v79
    %v95 = vshrl.u32 1326507024, %v80
    %v96 = vor.u32 %v94, %v95
    %vm97 = vcmp.lt.s32.totalorder %v78, 1
    %vm98 = vcmp.lt.s32.totalorder %v78, 2
    %vm99 = vcmp.lt.s32.totalorder %v78, 3
    %vm100 = vcmp.lt.s32.totalorder %v78, 4
    %v101 = vsel %vm97, %v81, %v84
    %v102 = vsel %vm100, %v90, 2102212464
    %v103 = vsel %vm99, %v87, %v102
    %v104 = vsel %vm98, %v101, %v103
    %v105 = vsel %vm97, %v84, %v87
    %v106 = vsel %vm100, %v93, 920167782
    %v107 = vsel %vm99, %v90, %v106
    %v108 = vsel %vm98, %v105, %v107
    %v109 = vsel %vm97, %v87, %v90
    %v110 = vsel %vm100, %v96, 1326507024
    %v111 = vsel %vm99, %v93, %v110
    %v112 = vsel %vm98, %v109, %v111
    %v113 = vshll.u32 %v73, 8
    %v114 = vmul.u32.u64.compose %v113, %v112
    %v115 = vextract.low.u32 %v114
    %v116 = vextract.high.u32 %v114
    %v117 = vmul.u32.u64.compose %v113, %v108
    %v118 = vextract.low.u32 %v117
    %v119 = vextract.high.u32 %v117
    %v120 = vmul.u32 %v113, %v104
    %v121 = vadd.s32 %v116, %v118
    %vm122 = vc.u32 %v116, %v118
    %v123 = vadd.s32 %v119, 1
    %v124 = vsel %vm122, %v123, %v119
    %v125 = vadd.s32 %v120, %v124
    %v126 = vadd.s32 %v125, 536870912
    %v127 = vshrl.u32 %v126, 30
    %v128 = vshll.u32 %v127, 30
    %v129 = vsub.s32 %v125, %v128
    %vm130 = vcmp.lt.s32.totalorder %v129, 0
    %v131 = vsub.s32 0, %v129
    %v132 = vsel %vm130, %v131, %v129
    %v133 = vclz %v132
    %v134 = vsub.s32 %v133, 2
    %vm135 = vcmp.gt.s32.totalorder 0, %v134
    %v136 = vsel %vm135, 0, %v134
    %v137 = vsub.s32 32, %v136
    %v138 = vshll.u32 %v129, %v136
    %v139 = vshrl.u32 %v121, %v137
    %v140 = vor.u32 %v138, %v139
    %v141 = vsub.s32 4294967266, %v136
    %v142 = vadd.s32 %v141, 127
    %v143 = vshll.u32 %v142, 23
    %v144 = vor.u32 4788187, %v143
    %v145 = vand.u32 2147483647, %v144
    %v147 = vcvt.s32.f32 %v140
    %v148 = vmul.f32 %v147, %v145
    %v149 = vxor.u32 %v148, 2147483648
    %v150 = vsel %vm67, %v149, %v148
    %v151 = vsub.s32 4, %v127
    %v152 = vsel %vm67, %v151, %v127
    %v153 = vsel %vm66, %v64, %v150
    %v154 = vsel %vm66, 0, %v152
    %v155 = vcosq.f32.pop %v153
    %v156 = vsinq.f32.pop %v153
    %vm157 = vweird.f32 %v64
    %v158 = vand.u32 %v154, 3
    %vm159 = vcmp.lt.s32.totalorder %v158, 2
    %vm160 = vcmp.eq.s32.totalorder %v158, 0
    %v161 = vxor.u32 %v156, 2147483648
    %v162 = vsel %vm160, %v155, %v161
    %vm163 = vcmp.eq.s32.totalorder %v158, 2
    %v164 = vxor.u32 %v155, 2147483648
    %v165 = vsel %vm163, %v164, %v156
    %v166 = vsel %vm159, %v162, %v165
    %v167 = vsel %vm157, nan, %v166
    %168 = vst [vmem:[#allocation2] sm:$0xff] %v167
    // Predicated region
    $region14: #{tpu_custom_call.1} parent=1 // pred_check
      _
    $region15: #{tpu_custom_call.1} parent=1 // pred_check_branch
      %170 = sbr.rel (0) target = $region17
    $region16: #{tpu_custom_call.1} parent=1 // pred_region
      %s172 = ssub.s32 128, 128
      %173 = vsyncadd [#allocation3], %s172
      %s175 = sshll.u32 [#allocation2], 4
      %s176 = int_to_ptr.vmem [resolvable:$true] %s175
      %178 = dma.vmem_to_hbm [thread:$0]  %s176, 128, %s3, [#allocation3]
    $region17: #{tpu_custom_call.1} parent=1 // pred_fallthru
      _
    // Predicated region
    $region18: #{tpu_custom_call.1} parent=1 // pred_check
      _
    $region19: #{tpu_custom_call.1} parent=1 // pred_check_branch
      %180 = sbr.rel (0) target = $region21
    $region20: #{tpu_custom_call.1} parent=1 // pred_region
      %181 = dma.done [#allocation3], 128
    $region21: #{tpu_custom_call.1} parent=1 // pred_fallthru
      _
    %182 = vsyncpa [#allocation3], 1

</llo_original>
